<compile_context>
chip_gen: v7x
topology: tpu7x:2x2x1
jax: 0.10.0
libtpu: 0.0.40
codegen_flags: <defaults>
</compile_context>

<pallas_src>
import jax
import jax.numpy as jnp
import numpy as np
from jax.experimental import pallas as pl
from jax.experimental.pallas import tpu as pltpu


def _round_up(x, m):
    return (x + m - 1) // m * m


def _vmem_budget_bytes():
    """Generation-aware scoped-VMEM ceiling (~96 MiB v5e/v6e, ~48 MiB v7x)."""
    try:
        cap = pltpu.get_tpu_info().vmem_capacity_bytes
    except Exception:
        cap = 128 * 2**20
    return int(cap) * 3 // 4


def _make_kernel(*, K, TL, single_dot, has_halo):
    """Conv1d('same') + bias + ReLU for one (batch, L-tile) grid step."""

    def _epilogue(window, w_ref, b_ref, o_ref):
        # window: (Cin, >= TL + K - 1) contiguous padded input columns for this tile.
        if single_dot:
            # Small K*Cin: build the (K*Cin, TL) patch in VMEM (K static lane-shifted
            # copies) and issue ONE MXU matmul with contraction K*Cin.
            patch = jnp.concatenate([window[:, k:k + TL] for k in range(K)], axis=0)
            acc = jnp.dot(w_ref[...], patch, preferred_element_type=jnp.float32)
        else:
            # Large Cin: K accumulating matmuls with contraction Cin (already fills
            # the MXU depth); K*Cin rows are never materialized.
            acc = jnp.dot(w_ref[0], window[:, 0:TL], preferred_element_type=jnp.float32)
            for k in range(1, K):
                acc = acc + jnp.dot(w_ref[k], window[:, k:k + TL],
                                    preferred_element_type=jnp.float32)
        acc = acc + b_ref[...]                       # (Cout, 1) lane-broadcast bias
        o_ref[0] = jnp.maximum(acc, 0.0).astype(o_ref.dtype)

    if has_halo:
        def kernel(xm_ref, xh_ref, w_ref, b_ref, o_ref):
            # Main tile + the 128-wide halo block immediately to its right are
            # contiguous columns of the padded input -> concat along lanes.
            window = jnp.concatenate([xm_ref[0], xh_ref[0]], axis=-1)
            _epilogue(window, w_ref, b_ref, o_ref)
    else:
        def kernel(xm_ref, w_ref, b_ref, o_ref):
            _epilogue(xm_ref[0], w_ref, b_ref, o_ref)

    return kernel


def epcot_conv_layer(x_ncl, weight, bias, *, tile_l=4096, compute_dtype=None,
                     out_dtype=None):
    """Forward of EPCOTConvLayer: y = relu(conv1d(x, weight, bias, padding='same')).

    x_ncl:  (B, C_in, L)    PyTorch NCL layout, kept end to end (lane-dense L).
    weight: (C_out, C_in, K)
    bias:   (C_out,)
    tile_l:        target L-tile width (multiple of 128 once L is tiled).
    compute_dtype: matmul-input dtype (jnp.bfloat16 is safe on v5e/v6e/v7x;
                   accumulation and the bias+ReLU epilogue stay f32).
    out_dtype:     output dtype (bf16 halves the dominant output HBM stream).
    returns (B, C_out, L)
    """
    B, Cin, L = x_ncl.shape
    Cout, Cin_w, K = weight.shape
    assert Cin_w == Cin and bias.shape == (Cout,)
    out_dtype = jnp.dtype(out_dtype) if out_dtype is not None else x_ncl.dtype
    cdt = jnp.dtype(compute_dtype) if compute_dtype is not None else x_ncl.dtype
    isz_x = jnp.dtype(cdt).itemsize
    isz_o = jnp.dtype(out_dtype).itemsize

    # Cast ONCE, before any padding, so the wrapper never runs an f32-wide pass.
    x = x_ncl.astype(cdt)

    # Weight layout follows the kernel strategy.
    single_dot = (K * Cin) <= 256
    if single_dot:
        w_kern = jnp.transpose(weight, (0, 2, 1)).reshape(Cout, K * Cin).astype(cdt)
    else:
        w_kern = jnp.transpose(weight, (2, 0, 1)).astype(cdt)        # (K, Cout, Cin)
    b_kern = bias.reshape(Cout, 1).astype(jnp.float32)

    budget = _vmem_budget_bytes()
    pad_left = (K - 1) // 2                     # torch Conv1d(padding='same') convention

    # ---- choose the L tile ---------------------------------------------------
    halo_w = _round_up(max(K - 1, 1), 128)      # halo block width (>= K-1, lane-aligned)
    TL_cap = max(halo_w, (int(tile_l) // halo_w) * halo_w)
    if L > TL_cap:
        TL = TL_cap
    elif B == 1 and L >= 2 * halo_w:
        TL = _round_up(-(-L // 2), halo_w)      # >=2 grid steps keeps both v7x TCs busy
    else:
        TL = L                                  # one full-length tile

    sub = 16                                    # conservative sublane padding

    def _tile_bytes(tl):
        n_tiles = -(-L // tl)
        halo = (n_tiles > 1) and (K > 1)
        in_w = tl if n_tiles > 1 else L + K - 1
        b = 2 * _round_up(Cin, sub) * _round_up(in_w, 128) * isz_x         # main x blocks
        if halo:
            b += 2 * _round_up(Cin, sub) * halo_w * isz_x                  # halo blocks
        b += 2 * _round_up(Cout, sub) * _round_up(tl, 128) * isz_o         # out blocks
        if single_dot:
            b += 2 * _round_up(Cout, sub) * _round_up(K * Cin, 128) * isz_x
            b += _round_up(K * Cin, sub) * _round_up(tl, 128) * isz_x      # patch temp
        else:
            b += 2 * K * _round_up(Cout, sub) * _round_up(Cin, 128) * isz_x
        b += 2 * _round_up(Cout, sub) * 128 * 4                            # bias
        b += _round_up(Cin, sub) * _round_up(tl + halo_w, 128) * isz_x     # window temp
        b += 2 * _round_up(Cout, sub) * _round_up(tl, 128) * 4             # f32 accumulator
        return b + (4 << 20)                                               # margin

    while TL % halo_w == 0 and TL > halo_w and _tile_bytes(TL) > budget:
        TL = max(halo_w, (TL // 2 // halo_w) * halo_w)

    n_l = -(-L // TL)
    tiled = n_l > 1
    has_halo = tiled and K > 1
    vmem_limit = int(min(budget, max(_tile_bytes(TL), 16 << 20)))

    # ---- single padding pass (the only wrapper-side data movement) -----------
    Ltot = (n_l * TL + (halo_w if has_halo else 0)) if tiled else (L + K - 1)
    x_pad = jnp.pad(x, ((0, 0), (0, 0), (pad_left, Ltot - L - pad_left)))

    kernel = _make_kernel(K=K, TL=TL, single_dot=single_dot, has_halo=has_halo)

    if tiled:
        xm_spec = pl.BlockSpec((1, Cin, TL), lambda b, i: (b, 0, i))
    else:
        xm_spec = pl.BlockSpec((1, Cin, Ltot), lambda b, i: (b, 0, 0))
    if single_dot:
        w_spec = pl.BlockSpec((Cout, K * Cin), lambda b, i: (0, 0))
    else:
        w_spec = pl.BlockSpec((K, Cout, Cin), lambda b, i: (0, 0, 0))
    b_spec = pl.BlockSpec((Cout, 1), lambda b, i: (0, 0))

    if has_halo:
        stride = TL // halo_w
        halo_spec = pl.BlockSpec((1, Cin, halo_w),
                                 lambda b, i: (b, 0, (i + 1) * stride))
        in_specs = [xm_spec, halo_spec, w_spec, b_spec]
        args = (x_pad, x_pad, w_kern, b_kern)       # same array, two views
    else:
        in_specs = [xm_spec, w_spec, b_spec]
        args = (x_pad, w_kern, b_kern)

    cost = pl.CostEstimate(
        flops=2 * B * L * K * Cin * Cout,
        transcendentals=0,
        bytes_accessed=int(x_pad.size * isz_x + w_kern.size * isz_x
                           + Cout * 4 + B * Cout * L * isz_o))

    return pl.pallas_call(
        kernel,
        out_shape=jax.ShapeDtypeStruct((B, Cout, L), out_dtype),
        grid=(B, n_l),
        in_specs=in_specs,
        out_specs=pl.BlockSpec((1, Cout, TL), lambda b, i: (b, 0, i)),
        compiler_params=pltpu.CompilerParams(
            dimension_semantics=("parallel", "parallel"),
            vmem_limit_bytes=vmem_limit),
        cost_estimate=cost,
    )(*args)


def _reference(x, weight, bias):
    """Pure-JAX reference matching torch Conv1d(padding='same') + ReLU."""
    K = weight.shape[-1]
    pad_left = (K - 1) // 2
    y = jax.lax.conv_general_dilated(
        x, weight, window_strides=(1,),
        padding=[(pad_left, (K - 1) - pad_left)],
        dimension_numbers=("NCH", "OIH", "NCH"),
        precision=jax.lax.Precision.HIGHEST)
    return jnp.maximum(y + bias[None, :, None], 0.0)


if __name__ == "__main__":
    key = jax.random.PRNGKey(0)

    def check(B, Cin, Cout, L, K, seed, rtol=1e-4, atol=1e-4, **kw):
        kx, kww, kb = jax.random.split(jax.random.fold_in(key, seed), 3)
        x = jax.random.normal(kx, (B, Cin, L), jnp.float32)
        w = jax.random.normal(kww, (Cout, Cin, K), jnp.float32) * 0.1
        b = jax.random.normal(kb, (Cout,), jnp.float32) * 0.1
        out = jax.block_until_ready(epcot_conv_layer(x, w, b, **kw))
        ref = _reference(x, w, b)
        assert out.shape == (B, Cout, L)
        np.testing.assert_allclose(np.asarray(out.astype(jnp.float32)),
                                   np.asarray(ref), rtol=rtol, atol=atol)

    # Small module-consistent shape: single full-length tile (untiled path).
    check(2, 4, 8, 16, 3, seed=0)
    # Tiled path with halo block + partial (masked) last L tile, odd K.
    check(2, 4, 32, 300, 9, seed=1, tile_l=128)
    # Even kernel size ('same' left/right split) + B==1 megacore L split.
    check(1, 4, 16, 512, 10, seed=2)
    # Large-Cin path: K accumulating matmuls with contraction Cin.
    check(1, 64, 32, 256, 5, seed=3)
    # bf16 matmul inputs + bf16 output (accumulation / epilogue stay f32).
    check(2, 4, 8, 200, 3, seed=4, compute_dtype=jnp.bfloat16,
          out_dtype=jnp.bfloat16, rtol=5e-2, atol=5e-2)

    print("KERNEL_OK")
</pallas_src>

<mosaic_0001>
module attributes {stable_mosaic.version = 11 : i64} {
  func.func @kernel(%arg0: i32, %arg1: i32, %arg2: memref<1x4x18xf32, #tpu.memory_space<vmem>>, %arg3: memref<8x12xf32, #tpu.memory_space<vmem>>, %arg4: memref<8x1xf32, #tpu.memory_space<vmem>>, %arg5: memref<1x8x16xf32, #tpu.memory_space<vmem>>) attributes {dimension_semantics = [#tpu.dimension_semantics<parallel>, #tpu.dimension_semantics<parallel>], iteration_bounds = array<i64: 2, 1>, scalar_prefetch = 0 : i64, scratch_operands = 0 : i64, tpu.core_type = #tpu.core_type<tc>, window_params = [{transform_indices = @transform_0, window_bounds = array<i64: 1, 4, 18>}, {pipeline_mode = #tpu.pipeline_mode<synchronous>, transform_indices = @transform_1, window_bounds = array<i64: 8, 12>}, {pipeline_mode = #tpu.pipeline_mode<synchronous>, transform_indices = @transform_2, window_bounds = array<i64: 8, 1>}, {transform_indices = @transform_3, window_bounds = array<i64: 1, 8, 16>}]} {
    %c0 = arith.constant 0 : index
    %c0_0 = arith.constant 0 : index
    %c0_1 = arith.constant 0 : index
    %0 = vector.load %arg2[%c0, %c0_0, %c0_1] : memref<1x4x18xf32, #tpu.memory_space<vmem>>, vector<1x4x18xf32>
    %1 = vector.shape_cast %0 : vector<1x4x18xf32> to vector<4x18xf32>
    %2 = vector.extract_strided_slice %1 {offsets = [0, 0], sizes = [4, 16], strides = [1, 1]} : vector<4x18xf32> to vector<4x16xf32>
    %3 = vector.extract_strided_slice %1 {offsets = [0, 1], sizes = [4, 16], strides = [1, 1]} : vector<4x18xf32> to vector<4x16xf32>
    %4 = vector.extract_strided_slice %1 {offsets = [0, 2], sizes = [4, 16], strides = [1, 1]} : vector<4x18xf32> to vector<4x16xf32>
    %5 = tpu.concatenate %2, %3, %4 in 0 : vector<4x16xf32>, vector<4x16xf32>, vector<4x16xf32> -> vector<12x16xf32>
    %c0_2 = arith.constant 0 : index
    %c0_3 = arith.constant 0 : index
    %6 = vector.load %arg3[%c0_2, %c0_3] : memref<8x12xf32, #tpu.memory_space<vmem>>, vector<8x12xf32>
    %cst = arith.constant dense<0.000000e+00> : vector<8x16xf32>
    %7 = tpu.matmul %6, %5, %cst {dimension_numbers = #tpu.dot_dimension_numbers<[1], [0], [0], [1], [0, 0, 1, 1], [], []>} : vector<8x12xf32>, vector<12x16xf32>, vector<8x16xf32> -> vector<8x16xf32>
    %c0_4 = arith.constant 0 : index
    %c0_5 = arith.constant 0 : index
    %8 = vector.load %arg4[%c0_4, %c0_5] : memref<8x1xf32, #tpu.memory_space<vmem>>, vector<8x1xf32>
    %9 = vector.broadcast %8 : vector<8x1xf32> to vector<8x16xf32>
    %10 = arith.addf %7, %9 : vector<8x16xf32>
    %cst_6 = arith.constant 0.000000e+00 : f32
    %11 = vector.broadcast %cst_6 : f32 to vector<8x16xf32>
    %12 = arith.maximumf %10, %11 : vector<8x16xf32>
    %c0_7 = arith.constant 0 : index
    %c0_8 = arith.constant 0 : index
    %c0_9 = arith.constant 0 : index
    %13 = vector.load %arg5[%c0_7, %c0_8, %c0_9] : memref<1x8x16xf32, #tpu.memory_space<vmem>>, vector<1x8x16xf32>
    %14 = vector.shape_cast %13 : vector<1x8x16xf32> to vector<8x16xf32>
    %15 = vector.shape_cast %12 : vector<8x16xf32> to vector<1x8x16xf32>
    tpu.vector_store %arg5[%c0_7, %c0_8, %c0_9], %15 {strides = array<i32>} : memref<1x8x16xf32, #tpu.memory_space<vmem>>, vector<1x8x16xf32>,
    return
  }
  func.func @transform_0(%arg0: i32, %arg1: i32) -> (i32, i32, i32) {
    %c0_i32 = arith.constant 0 : i32
    %c0_i32_0 = arith.constant 0 : i32
    %c0_i32_1 = arith.constant 0 : i32
    return %arg0, %c0_i32, %c0_i32_0 : i32, i32, i32
  }
  func.func @transform_1(%arg0: i32, %arg1: i32) -> (i32, i32) {
    %c0_i32 = arith.constant 0 : i32
    %c0_i32_0 = arith.constant 0 : i32
    %c0_i32_1 = arith.constant 0 : i32
    return %c0_i32, %c0_i32_0 : i32, i32
  }
  func.func @transform_2(%arg0: i32, %arg1: i32) -> (i32, i32) {
    %c0_i32 = arith.constant 0 : i32
    %c0_i32_0 = arith.constant 0 : i32
    %c0_i32_1 = arith.constant 0 : i32
    return %c0_i32, %c0_i32_0 : i32, i32
  }
  func.func @transform_3(%arg0: i32, %arg1: i32) -> (i32, i32, i32) {
    %c0_i32 = arith.constant 0 : i32
    %c0_i32_0 = arith.constant 0 : i32
    return %arg0, %c0_i32, %arg1 : i32, i32, i32
  }
}

</mosaic_0001>

<llo_original>
// kernel: tpu_custom_call.1
$region0: #{tpu_custom_call.1}
  #allocation0 [shape = 'u32[]', space=smem, size = 0x4, offset = 0x4, fixed_abs, tag = 'smem constant byte address 0x4 - core index']
  #allocation1 [shape = 'u32[144,128]{1,0:T(1,128)}', space=vmem, size = 0x12000, scoped, tag = 'internal scratch']
  %s0 = inlined_call_operand.vmem [shape: f32[2,4,18], index: 0, kind: input, shape index: {}]
  %s1 = inlined_call_operand.hbm [shape: f32[8,12], index: 1, kind: input, shape index: {}]
  %s2 = inlined_call_operand.vmem [shape: f32[8,1], index: 2, kind: input, shape index: {}]
  %s3 = inlined_call_operand.hbm [shape: f32[2,8,16], index: 3, kind: output, shape index: {}]
  %s4 = sld [smem:[#allocation0]]
  $region49: #{tpu_custom_call.1} parent=0
    _
  %s6 = ssub.s32 1, %s4
  %s7 = scalar_select 0, %s6, %s4
  $region1: #{tpu_custom_call.1} parent=0
    #allocation2 [shape = 'u8[4096]{0}', space=vmem, size = 0x1000, scoped, tag = 'input window, operand 1, single buffered']
    #allocation3 [shape = 's32[2]{0}', space=sflag, size = 0x8, scoped, tag = 'scoped memory for tpu_custom_call.1']
    #allocation4 [shape = 's32[2]{0}', space=sflag, size = 0x8, scoped, tag = 'scoped memory for tpu_custom_call.1']
    #allocation5 [shape = 'u8[8192]{0}', space=vmem, size = 0x2000, scoped, tag = 'output window, operand 0']
    %8 = vsyncpa [#allocation3], 0
    %9 = vsyncpa [#allocation4], 0
    %s10 = scalar_lea.sflag [#allocation4], 1
    %11 = vsyncpa %s10, 0
    loop: start=0, step=1, limit=4
    $region2: #{tpu_custom_call.1} parent=1 // loop_pre_header
      _
    $region3: #{tpu_custom_call.1} parent=1 // loop_header
      %s13 = sphi 0, %s17
      %p14 = scmp.ge.s32.totalorder %s13, 4
      %s20 = sphi 0, %s32
      %s21 = sphi 0, %s28
      %s22 = sphi 0, %s20
      %s23 = sphi 0, %s21
      %s24 = sphi 0, %s22
      %s25 = sphi 0, %s23
      %s35 = sphi 0, %s37
      %s38 = sphi 0, %s35
      %s39 = sphi 0, %s38
      %s55 = sphi 0, %s39
      %s59 = sphi 0, %s59
      %s61 = sphi 0, %s59
      %s62 = sphi 0, %s61
      %s76 = sphi 0, %s62
      %s80 = sphi 0, %s80
      %s82 = sphi 0, %s80
      %s83 = sphi 0, %s82
      %s97 = sphi 0, %s83
      %s105 = sphi 0, %s107
      %s108 = sphi 0, %s105
      %s109 = sphi 0, %s108
      %s125 = sphi 0, %s109
    $region4: #{tpu_custom_call.1} parent=1 // loop_header_branch
      %16 = sbr.rel (%p14) target = $region8
    $region5: #{tpu_custom_call.1} parent=1 // loop_body
      %s18 = ssub.s32 %s13, 1
      %s19 = ssub.s32 %s13, 2
      %s26 = sadd.s32 1, %s21
      %p27 = scmp.ge.s32.totalorder %s26, 1
      %s28 = scalar_select %p27, 0, %s26
      %s29 = sadd.s32 1, %s20
      %s30 = scalar_select %p27, %s29, %s20
      %p31 = scmp.ge.s32.totalorder %s30, 2
      %s32 = scalar_select %p31, 0, %s30
      %s33 = ssub.s32 %s20, %s32
      %p34 = scmp.eq.s32.totalorder %s33, 0
      %s36 = sadd.s32 %s35, 1
      %s37 = scalar_select %p34, %s35, %s36
      %p40 = pneg %p34
      %p41 = scmp.eq.s32.totalorder %s13, 1
      %p42 = por %p40, %p41
      %p43 = scmp.ne.s32.totalorder %s35, %s38
      %p44 = scmp.eq.s32.totalorder %s13, 0
      %p45 = por %p43, %p44
      %p46 = scmp.ne.s32.totalorder %s35, %s38
      %p47 = scmp.eq.s32.totalorder %s18, 1
      %p48 = por %p46, %p47
      %p49 = scmp.ne.s32.totalorder %s38, %s39
      %p50 = scmp.eq.s32.totalorder %s18, 0
      %p51 = por %p49, %p50
      %p52 = scmp.ne.s32.totalorder %s38, %s39
      %p53 = scmp.eq.s32.totalorder %s19, 1
      %p54 = por %p52, %p53
      %p56 = scmp.ne.s32.totalorder %s39, %s55
      %p57 = scmp.eq.s32.totalorder %s19, 0
      %p58 = por %p56, %p57
      %s60 = sadd.s32 %s59, 1
      %p63 = scmp.eq.s32.totalorder %s13, 1
      %p64 = scmp.ne.s32.totalorder %s59, %s61
      %p65 = scmp.eq.s32.totalorder %s13, 0
      %p66 = por %p64, %p65
      %p67 = scmp.ne.s32.totalorder %s59, %s61
      %p68 = scmp.eq.s32.totalorder %s18, 1
      %p69 = por %p67, %p68
      %p70 = scmp.ne.s32.totalorder %s61, %s62
      %p71 = scmp.eq.s32.totalorder %s18, 0
      %p72 = por %p70, %p71
      %p73 = scmp.ne.s32.totalorder %s61, %s62
      %p74 = scmp.eq.s32.totalorder %s19, 1
      %p75 = por %p73, %p74
      %p77 = scmp.ne.s32.totalorder %s62, %s76
      %p78 = scmp.eq.s32.totalorder %s19, 0
      %p79 = por %p77, %p78
      %s81 = sadd.s32 %s80, 1
      %p84 = scmp.eq.s32.totalorder %s13, 1
      %p85 = scmp.ne.s32.totalorder %s80, %s82
      %p86 = scmp.eq.s32.totalorder %s13, 0
      %p87 = por %p85, %p86
      %p88 = scmp.ne.s32.totalorder %s80, %s82
      %p89 = scmp.eq.s32.totalorder %s18, 1
      %p90 = por %p88, %p89
      %p91 = scmp.ne.s32.totalorder %s82, %s83
      %p92 = scmp.eq.s32.totalorder %s18, 0
      %p93 = por %p91, %p92
      %p94 = scmp.ne.s32.totalorder %s82, %s83
      %p95 = scmp.eq.s32.totalorder %s19, 1
      %p96 = por %p94, %p95
      %p98 = scmp.ne.s32.totalorder %s83, %s97
      %p99 = scmp.eq.s32.totalorder %s19, 0
      %p100 = por %p98, %p99
      %s101 = ssub.s32 %s20, %s32
      %s102 = ssub.s32 %s21, %s28
      %s103 = sor.u32 %s101, %s102
      %p104 = scmp.eq.s32.totalorder %s103, 0
      %s106 = sadd.s32 %s105, 1
      %s107 = scalar_select %p104, %s105, %s106
      %p110 = pneg %p104
      %p111 = scmp.eq.s32.totalorder %s13, 1
      %p112 = por %p110, %p111
      %p113 = scmp.ne.s32.totalorder %s105, %s108
      %p114 = scmp.eq.s32.totalorder %s13, 0
      %p115 = por %p113, %p114
      %p116 = scmp.ne.s32.totalorder %s105, %s108
      %p117 = scmp.eq.s32.totalorder %s18, 1
      %p118 = por %p116, %p117
      %p119 = scmp.ne.s32.totalorder %s108, %s109
      %p120 = scmp.eq.s32.totalorder %s18, 0
      %p121 = por %p119, %p120
      %p122 = scmp.ne.s32.totalorder %s108, %s109
      %p123 = scmp.eq.s32.totalorder %s19, 1
      %p124 = por %p122, %p123
      %p126 = scmp.ne.s32.totalorder %s109, %s125
      %p127 = scmp.eq.s32.totalorder %s19, 0
      %p128 = por %p126, %p127
      %p129 = scmp.le.s32.totalorder 1, %s13
      %p130 = scmp.lt.s32.totalorder %s13, 3
      %p131 = pnand %p129, %p130
      %p132 = pneg %p131
      // Predicated region
      $region9: #{tpu_custom_call.1} parent=5 // pred_check
        _
      $region10: #{tpu_custom_call.1} parent=5 // pred_check_branch
        %134 = sbr.rel (%p131) target = $region12
      $region11: #{tpu_custom_call.1} parent=5 // pred_region
        %s135 = ssub.s32 %s13, 1
        // Predicated region
        $region13: #{tpu_custom_call.1} parent=11 // pred_check
          %p136 = pneg %p72
        $region14: #{tpu_custom_call.1} parent=11 // pred_check_branch
          %138 = sbr.rel (%p136) target = $region16
        $region15: #{tpu_custom_call.1} parent=11 // pred_region
          %s140 = ssub.s32 128, 128
          %141 = vsyncadd [#allocation3], %s140
          %s143 = sshll.u32 [#allocation2], 4
          %s144 = int_to_ptr.vmem [resolvable:$true] %s143
          %146 = dma.hbm_to_vmem [thread:$0]  %s1, 128, %s144, [#allocation3]
        $region16: #{tpu_custom_call.1} parent=11 // pred_fallthru
          _
        // Predicated region
        $region17: #{tpu_custom_call.1} parent=11 // pred_check
          %p147 = pneg %p93
        $region18: #{tpu_custom_call.1} parent=11 // pred_check_branch
          %149 = sbr.rel (%p147) target = $region20
        $region19: #{tpu_custom_call.1} parent=11 // pred_region
          _
        $region20: #{tpu_custom_call.1} parent=11 // pred_fallthru
          _
      $region12: #{tpu_custom_call.1} parent=5 // pred_fallthru
        _
      %p150 = scmp.lt.s32.totalorder %s13, 2
      // Predicated region
      $region21: #{tpu_custom_call.1} parent=5 // pred_check
        %p151 = pneg %p150
      $region22: #{tpu_custom_call.1} parent=5 // pred_check_branch
        %153 = sbr.rel (%p151) target = $region24
      $region23: #{tpu_custom_call.1} parent=5 // pred_region
        // Predicated region
        $region25: #{tpu_custom_call.1} parent=23 // pred_check
          %p154 = pneg %p45
        $region26: #{tpu_custom_call.1} parent=23 // pred_check_branch
          %156 = sbr.rel (%p154) target = $region28
        $region27: #{tpu_custom_call.1} parent=23 // pred_region
          %p157 = scmp.lt.s32.totalorder %s20, 1
          %s158 = scalar_select %p157, %s20, 1
          %s159 = smul.addr %s158, 4
          %s160 = scalar_lea.vmem %s0, %s159
        $region28: #{tpu_custom_call.1} parent=23 // pred_fallthru
          _
      $region24: #{tpu_custom_call.1} parent=5 // pred_fallthru
        _
      %p161 = scmp.le.s32.totalorder 1, %s13
      %p162 = scmp.lt.s32.totalorder %s13, 3
      %p163 = pnand %p161, %p162
      %p164 = pneg %p163
      // Predicated region
      $region29: #{tpu_custom_call.1} parent=5 // pred_check
        _
      $region30: #{tpu_custom_call.1} parent=5 // pred_check_branch
        %166 = sbr.rel (%p163) target = $region32
      $region31: #{tpu_custom_call.1} parent=5 // pred_region
        %s167 = ssub.s32 %s13, 1
        // Predicated region
        $region33: #{tpu_custom_call.1} parent=31 // pred_check
          %p168 = pneg %p72
        $region34: #{tpu_custom_call.1} parent=31 // pred_check_branch
          %170 = sbr.rel (%p168) target = $region36
        $region35: #{tpu_custom_call.1} parent=31 // pred_region
          %171 = dma.done [#allocation3], 128
        $region36: #{tpu_custom_call.1} parent=31 // pred_fallthru
          _
        %p172 = scmp.lt.s32.totalorder %s22, 1
        %s173 = scalar_select %p172, %s22, 1
        %s174 = smul.addr %s173, 4
        %s175 = scalar_lea.vmem %s0, %s174
        %p176 = pneg %p51
        %p177 = pneg %p48
        %p178 = pneg %p72
        %p179 = pneg %p69
        %p180 = pneg %p93
        %p181 = pneg %p90
        %p182 = pneg %p121
        %p183 = pneg %p118
        %s184 = sand.u32 %s108, 1
        %s185 = scalar_lea.sflag [#allocation4], %s184
        %s186 = sand.u32 %s108, 1
        %s187 = smul.addr %s186, 8
        %s188 = scalar_lea.vmem [#allocation5], %s187
        %p189 = scmp.lt.s32.totalorder %s22, 1
        %s190 = scalar_select %p189, %s22, 1
        %s191 = smul.addr %s190, 4
        %s192 = scalar_lea.vmem %s0, %s191
        %v193 = vld [vmem:[%s192] sm:$0xf]
        %v195 = vrot.slane %v193, 4
        %196 = vrot.lane.b32.xlu0 %v195, 127
        %v197 = vpop.permute.xlu0 %196
        %199 = vrot.lane.b32.xlu0 %v193, 126
        %v200 = vpop.permute.xlu0 %199
        %vm201 = vcmask 1043456
        %v202 = vsel %vm201, %v193, %v197
        %v203 = vld [vmem:[#allocation2] sm:$0xff]
        %v204 = vld [vmem:[%s2] sm:$0xff]
        %206 = vset.pattern.permute.xlu0 0
        %207 = vperm.xlu0 %206, %v204
        %v208 = vpop.permute.xlu0 %207
        %vm210 = vcmask 97280
        %v212 = vsel %vm210, %v203, 0
        %v214 = vsel %vm201, %v200, 0
        %216 = vmatprep.subr.mxu0 0.0
        %217 = vmatpush1.msra.mxu0 %v202
        %218 = vmatprep.subr.mxu0 0.0
        %219 = vmatpush1.msra.mxu0 %v214
        %220 = vmatprep.subr.mxu0 0.0
        %221 = vmatpush1.msra.mxu0 0.0
        %222 = vmatprep.subr.mxu0 0.0
        %223 = vmatpush1.msra.mxu0 0.0
        %224 = vmatprep.subr.mxu0 0.0
        %225 = vmatpush1.msra.mxu0 0.0
        %226 = vmatprep.subr.mxu0 0.0
        %227 = vmatpush1.msra.mxu0 0.0
        %228 = vmatprep.subr.mxu0 0.0
        %229 = vmatpush1.msra.mxu0 0.0
        %230 = vmatprep.subr.mxu0 0.0
        %231 = vmatpush1.msra.mxu0 0.0
        %232 = vmatprep.subr.mxu0 0.0
        %233 = vmatpush1.msra.mxu0 0.0
        %234 = vmatprep.subr.mxu0 0.0
        %235 = vmatpush1.msra.mxu0 0.0
        %236 = vmatprep.subr.mxu0 0.0
        %237 = vmatpush1.msra.mxu0 0.0
        %238 = vmatprep.subr.mxu0 0.0
        %239 = vmatpush1.msra.mxu0 0.0
        %240 = vmatprep.subr.mxu0 0.0
        %241 = vmatpush1.msra.mxu0 0.0
        %242 = vmatprep.subr.mxu0 0.0
        %243 = vmatpush1.msra.mxu0 0.0
        %244 = vmatprep.subr.mxu0 0.0
        %245 = vmatpush1.msra.mxu0 0.0
        %246 = vmatprep.subr.mxu0 0.0
        %247 = vmatpush1.msra.mxu0 0.0
        %248 = vmatprep.subr.mxu0 0.0
        %249 = vmatpush1.msra.mxu0 0.0
        %250 = vmatprep.subr.mxu0 0.0
        %251 = vmatpush1.msra.mxu0 0.0
        %252 = vmatprep.subr.mxu0 0.0
        %253 = vmatpush1.msra.mxu0 0.0
        %254 = vmatprep.subr.mxu0 0.0
        %255 = vmatpush1.msra.mxu0 0.0
        %256 = vmatprep.subr.mxu0 0.0
        %257 = vmatpush1.msra.mxu0 0.0
        %258 = vmatprep.subr.mxu0 0.0
        %259 = vmatpush1.msra.mxu0 0.0
        %260 = vmatprep.subr.mxu0 0.0
        %261 = vmatpush1.msra.mxu0 0.0
        %262 = vmatprep.subr.mxu0 0.0
        %263 = vmatpush1.msra.mxu0 0.0
        %264 = vmatprep.subr.mxu0 0.0
        %265 = vmatpush1.msra.mxu0 0.0
        %266 = vmatprep.subr.mxu0 0.0
        %267 = vmatpush1.msra.mxu0 0.0
        %268 = vmatprep.subr.mxu0 0.0
        %269 = vmatpush1.msra.mxu0 0.0
        %270 = vmatprep.subr.mxu0 0.0
        %271 = vmatpush1.msra.mxu0 0.0
        %272 = vmatprep.subr.mxu0 0.0
        %273 = vmatpush1.msra.mxu0 0.0
        %274 = vmatprep.subr.mxu0 0.0
        %275 = vmatpush1.msra.mxu0 0.0
        %276 = vmatprep.subr.mxu0 0.0
        %277 = vmatpush1.msra.mxu0 0.0
        %278 = vmatprep.subr.mxu0 0.0
        %279 = vmatpush1.msra.mxu0 0.0
        %280 = vmatprep.mubr.f32.mxu0 0.0
        %281 = vmatmul.mubr.f32.gmra.mrb[0].mxu0 %v212
        %v282 = vpop.f32.mrb[0].mxu0
        %v283 = vadd.f32 %v208, %v282
        %v284 = vpop.f32.mrb[0].mxu0
        %285 = vdwg.mxu0
        %v286 = vmax.f32 %v283, 0.0
        %vm287 = vcmask 130048
        %288 = vst.msk [vmem:[%s188] sm:$0xff] %vm287, %v286
        %s289 = sand.u32 %s108, 1
        %s290 = scalar_lea.sflag [#allocation4], %s289
        %s291 = sand.u32 %s108, 1
        %s292 = smul.addr %s291, 8
        %s293 = scalar_lea.vmem [#allocation5], %s292
        // Predicated region
        $region37: #{tpu_custom_call.1} parent=31 // pred_check
          %p294 = pneg %p118
        $region38: #{tpu_custom_call.1} parent=31 // pred_check_branch
          %296 = sbr.rel (%p294) target = $region40
        $region39: #{tpu_custom_call.1} parent=31 // pred_region
          %s298 = ssub.s32 128, 128
          %299 = vsyncadd %s290, %s298
          %s300 = sadd.s32 %s23, %s22
          %s301 = smul.addr %s300, 128
          %s302 = scalar_lea.hbm %s3, %s301
          %s304 = sshll.u32 %s293, 4
          %s305 = int_to_ptr.vmem [resolvable:$true] %s304
          %307 = dma.vmem_to_hbm [thread:$0]  %s305, 128, %s302, %s290
        $region40: #{tpu_custom_call.1} parent=31 // pred_fallthru
          _
      $region32: #{tpu_custom_call.1} parent=5 // pred_fallthru
        _
      %p308 = scmp.le.s32.totalorder 2, %s13
      // Predicated region
      $region41: #{tpu_custom_call.1} parent=5 // pred_check
        %p309 = pneg %p308
      $region42: #{tpu_custom_call.1} parent=5 // pred_check_branch
        %311 = sbr.rel (%p309) target = $region44
      $region43: #{tpu_custom_call.1} parent=5 // pred_region
        %s312 = ssub.s32 %s13, 2
        // Predicated region
        $region45: #{tpu_custom_call.1} parent=43 // pred_check
          %p313 = pneg %p124
        $region46: #{tpu_custom_call.1} parent=43 // pred_check_branch
          %315 = sbr.rel (%p313) target = $region48
        $region47: #{tpu_custom_call.1} parent=43 // pred_region
          %s316 = sand.u32 %s109, 1
          %s317 = scalar_lea.sflag [#allocation4], %s316
          %s318 = sand.u32 %s109, 1
          %s319 = smul.addr %s318, 8
          %s320 = scalar_lea.vmem [#allocation5], %s319
          %321 = dma.done %s317, 128
        $region48: #{tpu_custom_call.1} parent=43 // pred_fallthru
          _
      $region44: #{tpu_custom_call.1} parent=5 // pred_fallthru
        _
    $region6: #{tpu_custom_call.1} parent=1 // loop_footer
      %s17 = sadd.s32 1, %s13
    $region7: #{tpu_custom_call.1} parent=1 // loop_footer_branch
      %12 = sbr.rel target = $region3
    $region8: #{tpu_custom_call.1} parent=1 // loop_exit
      _
    %322 = vsyncpa [#allocation3], 1
    %s323 = scalar_lea.sflag [#allocation3], 1
    %324 = vsyncpa %s323, 1
    %325 = vsyncpa [#allocation4], 1
    %s326 = scalar_lea.sflag [#allocation4], 1
    %327 = vsyncpa %s326, 1

</llo_original>
